<compile_context>
chip_gen: v7x
topology: tpu7x:2x2x1
jax: 0.10.0
libtpu: 0.0.40
codegen_flags: <defaults>
</compile_context>

<pallas_src>
import functools

import jax
import jax.numpy as jnp
from jax.experimental import pallas as pl
from jax.experimental.pallas import tpu as pltpu

C_IN = 256
C_MID1 = 256
C_MID2 = 128
C_OUT = 1


def _netd_pixel_kernel(x_ref, w1_ref, w2_ref, w3_ref, o_ref):
    # x_ref : (nb, 256, tm)  bf16 channels-first pixel tile(s)
    # w1_ref: (256, 256)     bf16, PyTorch (C_out, C_in) layout
    # w2_ref: (128, 256)     bf16
    # w3_ref: (1, 128)       bf16
    # o_ref : (nb, 1, tm)    f32
    w1 = w1_ref[...]
    w2 = w2_ref[...]
    w3 = w3_ref[...]
    nb = x_ref.shape[0]                       # static batch-block size
    for b in range(nb):                       # small static loop, amortizes per-step cost
        x = x_ref[b]                          # (256, tm) bf16
        h1 = jnp.dot(w1, x, preferred_element_type=jnp.float32)      # (256, tm) f32 acc
        h1 = jnp.maximum(h1, 0.0).astype(x.dtype)                    # relu(conv1) -> bf16
        h2 = jnp.dot(w2, h1, preferred_element_type=jnp.float32)     # (128, tm) f32 acc
        h2 = jnp.maximum(h2, 0.0).astype(x.dtype)                    # relu(conv2) -> bf16
        logits = jnp.dot(w3, h2, preferred_element_type=jnp.float32) # (1, tm)
        o_ref[b] = jax.nn.sigmoid(logits).astype(o_ref.dtype)        # sigmoid(conv3)


def netd_pixel_forward(x_nchw, w1, w2, w3, *, tile_pixels=2048,
                       compute_dtype=jnp.bfloat16):
    """x_nchw: (N, 256, H, W) -> (N, 1, H, W) float32.

    Weights are in the native PyTorch 1x1-conv layout (C_out, C_in):
      w1: (256, 256) == conv1.weight[:, :, 0, 0]
      w2: (128, 256) == conv2.weight[:, :, 0, 0]
      w3: (1,   128) == conv3.weight[:, :, 0, 0]
    """
    N, C, H, W = x_nchw.shape
    assert C == C_IN
    HW = H * W

    # (N, C, H*W) is a free view of NCHW; the only real work is the one-time
    # bf16 cast, which fuses into the producer under jit.
    x3 = x_nchw.reshape(N, C, HW).astype(compute_dtype)
    w1c = w1.astype(compute_dtype)
    w2c = w2.astype(compute_dtype)
    w3c = w3.astype(compute_dtype)

    # Pixel tile: lane-aligned multiple of 128, or the full extent for small maps.
    tm = max(128, (int(tile_pixels) // 128) * 128)
    if HW <= tm:
        tm = HW
        # Small feature map: pack several images per grid step, but keep
        # >= 2 grid steps when N > 1 so both v7x TensorCores get work.
        nb = max(1, min(N, int(tile_pixels) // max(HW, 1)))
        if N > 1:
            nb = min(nb, -(-N // 2))
    else:
        nb = 1

    # No padding: ragged last blocks (batch or pixel axis) use Pallas edge
    # masking — safe because every op is per-pixel.
    grid = (pl.cdiv(N, nb), pl.cdiv(HW, tm))

    elem_bytes = x3.dtype.itemsize            # 2 for bf16
    flops = 2 * N * HW * (C_IN * C_MID1 + C_MID1 * C_MID2 + C_MID2 * C_OUT)
    bytes_accessed = (N * HW * C_IN * elem_bytes            # bf16 input
                      + N * HW * C_OUT * 4                  # f32 output
                      + (w1c.size + w2c.size + w3c.size) * elem_bytes)
    cost = pl.CostEstimate(flops=flops,
                           transcendentals=2 * N * HW,      # sigmoid = exp + recip
                           bytes_accessed=bytes_accessed)

    out = pl.pallas_call(
        _netd_pixel_kernel,
        out_shape=jax.ShapeDtypeStruct((N, C_OUT, HW), jnp.float32),
        grid_spec=pltpu.PrefetchScalarGridSpec(
            num_scalar_prefetch=0,
            grid=grid,
            in_specs=[
                pl.BlockSpec((nb, C_IN, tm), lambda n, i: (n, 0, i)),    # x tile
                pl.BlockSpec((C_MID1, C_IN), lambda n, i: (0, 0)),       # W1 resident
                pl.BlockSpec((C_MID2, C_MID1), lambda n, i: (0, 0)),     # W2 resident
                pl.BlockSpec((C_OUT, C_MID2), lambda n, i: (0, 0)),      # W3 resident
            ],
            out_specs=pl.BlockSpec((nb, C_OUT, tm), lambda n, i: (n, 0, i)),
        ),
        compiler_params=pltpu.CompilerParams(
            dimension_semantics=("parallel", "parallel")),
        cost_estimate=cost,
    )(x3, w1c, w2c, w3c)

    return out.reshape(N, C_OUT, H, W)
    # TODO(synk): context=True branch (global avg-pool feature of conv2) not implemented.


def _init_params(key):
    # normal_init(m, 0, 0.01): weights ~ N(0, 0.01), no bias.
    # PyTorch conv weight is (C_out, C_in, 1, 1); we keep (C_out, C_in).
    k1, k2, k3 = jax.random.split(key, 3)
    w1 = jax.random.normal(k1, (C_MID1, C_IN), jnp.float32) * 0.01
    w2 = jax.random.normal(k2, (C_MID2, C_MID1), jnp.float32) * 0.01
    w3 = jax.random.normal(k3, (C_OUT, C_MID2), jnp.float32) * 0.01
    return w1, w2, w3


def _reference(x_nchw, w1, w2, w3):
    # Pure-JAX f32 reference (NHWC math).
    x = jnp.transpose(x_nchw, (0, 2, 3, 1))
    h1 = jnp.maximum(x @ w1.T, 0.0)
    h2 = jnp.maximum(h1 @ w2.T, 0.0)
    y = jax.nn.sigmoid(h2 @ w3.T)
    return jnp.transpose(y, (0, 3, 1, 2))


if __name__ == "__main__":
    key = jax.random.PRNGKey(0)
    kx, kp = jax.random.split(key)

    # Small shapes consistent with the module (conv1 requires 256 in-channels).
    N, H, W = 2, 16, 16
    x = jax.random.normal(kx, (N, C_IN, H, W), jnp.float32)
    w1, w2, w3 = _init_params(kp)

    fwd = jax.jit(netd_pixel_forward)
    out = jax.block_until_ready(fwd(x, w1, w2, w3))
    ref = _reference(x, w1, w2, w3)

    assert out.shape == (N, 1, H, W), out.shape
    max_err = float(jnp.max(jnp.abs(out - ref)))
    # bf16 MXU inputs with f32 accumulation vs f32 reference: tiny error on a
    # sigmoid head with N(0, 0.01) weights.
    assert max_err < 5e-3, f"mismatch vs JAX reference: max abs err {max_err}"
    print("KERNEL_OK")
</pallas_src>

<mosaic_0001>
module attributes {stable_mosaic.version = 11 : i64} {
  func.func @_netd_pixel_kernel(%arg0: i32, %arg1: i32, %arg2: memref<1x256x256xbf16, #tpu.memory_space<vmem>>, %arg3: memref<256x256xbf16, #tpu.memory_space<vmem>>, %arg4: memref<128x256xbf16, #tpu.memory_space<vmem>>, %arg5: memref<1x128xbf16, #tpu.memory_space<vmem>>, %arg6: memref<1x1x256xf32, #tpu.memory_space<vmem>>) attributes {dimension_semantics = [#tpu.dimension_semantics<parallel>, #tpu.dimension_semantics<parallel>], iteration_bounds = array<i64: 2, 1>, scalar_prefetch = 0 : i64, scratch_operands = 0 : i64, tpu.core_type = #tpu.core_type<tc>, window_params = [{transform_indices = @transform_0, window_bounds = array<i64: 1, 256, 256>}, {pipeline_mode = #tpu.pipeline_mode<synchronous>, transform_indices = @transform_1, window_bounds = array<i64: 256, 256>}, {pipeline_mode = #tpu.pipeline_mode<synchronous>, transform_indices = @transform_2, window_bounds = array<i64: 128, 256>}, {pipeline_mode = #tpu.pipeline_mode<synchronous>, transform_indices = @transform_3, window_bounds = array<i64: 1, 128>}, {transform_indices = @transform_4, window_bounds = array<i64: 1, 1, 256>}]} {
    %c0 = arith.constant 0 : index
    %c0_0 = arith.constant 0 : index
    %0 = vector.load %arg3[%c0, %c0_0] : memref<256x256xbf16, #tpu.memory_space<vmem>>, vector<256x256xbf16>
    %c0_1 = arith.constant 0 : index
    %c0_2 = arith.constant 0 : index
    %1 = vector.load %arg4[%c0_1, %c0_2] : memref<128x256xbf16, #tpu.memory_space<vmem>>, vector<128x256xbf16>
    %c0_3 = arith.constant 0 : index
    %c0_4 = arith.constant 0 : index
    %2 = vector.load %arg5[%c0_3, %c0_4] : memref<1x128xbf16, #tpu.memory_space<vmem>>, vector<1x128xbf16>
    %c0_5 = arith.constant 0 : index
    %c0_6 = arith.constant 0 : index
    %c0_7 = arith.constant 0 : index
    %3 = vector.load %arg2[%c0_5, %c0_6, %c0_7] : memref<1x256x256xbf16, #tpu.memory_space<vmem>>, vector<1x256x256xbf16>
    %4 = vector.shape_cast %3 : vector<1x256x256xbf16> to vector<256x256xbf16>
    %cst = arith.constant dense<0.000000e+00> : vector<256x256xf32>
    %5 = tpu.matmul %0, %4, %cst {dimension_numbers = #tpu.dot_dimension_numbers<[1], [0], [0], [1], [0, 0, 1, 1], [], []>} : vector<256x256xbf16>, vector<256x256xbf16>, vector<256x256xf32> -> vector<256x256xf32>
    %cst_8 = arith.constant 0.000000e+00 : f32
    %6 = vector.broadcast %cst_8 : f32 to vector<256x256xf32>
    %7 = arith.maximumf %5, %6 : vector<256x256xf32>
    %8 = arith.truncf %7 : vector<256x256xf32> to vector<256x256xbf16>
    %cst_9 = arith.constant dense<0.000000e+00> : vector<128x256xf32>
    %9 = tpu.matmul %1, %8, %cst_9 {dimension_numbers = #tpu.dot_dimension_numbers<[1], [0], [0], [1], [0, 0, 1, 1], [], []>} : vector<128x256xbf16>, vector<256x256xbf16>, vector<128x256xf32> -> vector<128x256xf32>
    %cst_10 = arith.constant 0.000000e+00 : f32
    %10 = vector.broadcast %cst_10 : f32 to vector<128x256xf32>
    %11 = arith.maximumf %9, %10 : vector<128x256xf32>
    %12 = arith.truncf %11 : vector<128x256xf32> to vector<128x256xbf16>
    %cst_11 = arith.constant dense<0.000000e+00> : vector<1x256xf32>
    %13 = tpu.matmul %2, %12, %cst_11 {dimension_numbers = #tpu.dot_dimension_numbers<[1], [0], [0], [1], [0, 0, 1, 1], [], []>} : vector<1x128xbf16>, vector<128x256xbf16>, vector<1x256xf32> -> vector<1x256xf32>
    %14 = arith.negf %13 : vector<1x256xf32>
    %15 = math.exp %14 : vector<1x256xf32>
    %cst_12 = arith.constant 1.000000e+00 : f32
    %16 = vector.broadcast %cst_12 : f32 to vector<1x256xf32>
    %17 = arith.addf %16, %15 : vector<1x256xf32>
    %18 = arith.divf %16, %17 : vector<1x256xf32>
    %c0_13 = arith.constant 0 : index
    %c0_14 = arith.constant 0 : index
    %c0_15 = arith.constant 0 : index
    %19 = vector.load %arg6[%c0_13, %c0_14, %c0_15] : memref<1x1x256xf32, #tpu.memory_space<vmem>>, vector<1x1x256xf32>
    %20 = vector.shape_cast %19 : vector<1x1x256xf32> to vector<1x256xf32>
    %21 = vector.shape_cast %18 : vector<1x256xf32> to vector<1x1x256xf32>
    tpu.vector_store %arg6[%c0_13, %c0_14, %c0_15], %21 {strides = array<i32>} : memref<1x1x256xf32, #tpu.memory_space<vmem>>, vector<1x1x256xf32>,
    return
  }
  func.func @transform_0(%arg0: i32, %arg1: i32) -> (i32, i32, i32) {
    %c0_i32 = arith.constant 0 : i32
    %c0_i32_0 = arith.constant 0 : i32
    return %arg0, %c0_i32, %arg1 : i32, i32, i32
  }
  func.func @transform_1(%arg0: i32, %arg1: i32) -> (i32, i32) {
    %c0_i32 = arith.constant 0 : i32
    %c0_i32_0 = arith.constant 0 : i32
    %c0_i32_1 = arith.constant 0 : i32
    return %c0_i32, %c0_i32_0 : i32, i32
  }
  func.func @transform_2(%arg0: i32, %arg1: i32) -> (i32, i32) {
    %c0_i32 = arith.constant 0 : i32
    %c0_i32_0 = arith.constant 0 : i32
    %c0_i32_1 = arith.constant 0 : i32
    return %c0_i32, %c0_i32_0 : i32, i32
  }
  func.func @transform_3(%arg0: i32, %arg1: i32) -> (i32, i32) {
    %c0_i32 = arith.constant 0 : i32
    %c0_i32_0 = arith.constant 0 : i32
    %c0_i32_1 = arith.constant 0 : i32
    return %c0_i32, %c0_i32_0 : i32, i32
  }
  func.func @transform_4(%arg0: i32, %arg1: i32) -> (i32, i32, i32) {
    %c0_i32 = arith.constant 0 : i32
    %c0_i32_0 = arith.constant 0 : i32
    return %arg0, %c0_i32, %arg1 : i32, i32, i32
  }
}

</mosaic_0001>

<llo_original>
// kernel: netd_pixel_forward.1
$region0: #{netd_pixel_forward.1}
  #allocation0 [shape = 'u32[]', space=smem, size = 0x4, offset = 0x4, fixed_abs, tag = 'smem constant byte address 0x4 - core index']
  #allocation1 [shape = 'u32[144,128]{1,0:T(1,128)}', space=vmem, size = 0x12000, scoped, tag = 'internal scratch']
  %s0 = inlined_call_operand.vmem [shape: bf16[2,256,256], index: 0, kind: input, shape index: {}]
  %s1 = inlined_call_operand.vmem [shape: bf16[256,256], index: 1, kind: input, shape index: {}]
  %s2 = inlined_call_operand.vmem [shape: bf16[128,256], index: 2, kind: input, shape index: {}]
  %s3 = inlined_call_operand.vmem [shape: bf16[1,128], index: 3, kind: input, shape index: {}]
  %s4 = inlined_call_operand.vmem [shape: f32[2,1,256], index: 4, kind: output, shape index: {}]
  %s5 = sld [smem:[#allocation0]]
  $region49: #{netd_pixel_forward.1} parent=0
    _
  %s7 = ssub.s32 1, %s5
  %s8 = scalar_select 0, %s7, %s5
  loop: start=0, step=1, limit=4
  $region2: #{netd_pixel_forward.1} parent=0 // loop_pre_header
    _
  $region3: #{netd_pixel_forward.1} parent=0 // loop_header
    %s10 = sphi 0, %s14
    %p11 = scmp.ge.s32.totalorder %s10, 4
    %s17 = sphi 0, %s29
    %s18 = sphi 0, %s25
    %s19 = sphi 0, %s17
    %s20 = sphi 0, %s18
    %s21 = sphi 0, %s19
    %s22 = sphi 0, %s20
    %s34 = sphi 0, %s36
    %s37 = sphi 0, %s34
    %s38 = sphi 0, %s37
    %s54 = sphi 0, %s38
    %s58 = sphi 0, %s58
    %s60 = sphi 0, %s58
    %s61 = sphi 0, %s60
    %s75 = sphi 0, %s61
    %s79 = sphi 0, %s79
    %s81 = sphi 0, %s79
    %s82 = sphi 0, %s81
    %s96 = sphi 0, %s82
    %s100 = sphi 0, %s100
    %s102 = sphi 0, %s100
    %s103 = sphi 0, %s102
    %s117 = sphi 0, %s103
    %s125 = sphi 0, %s127
    %s128 = sphi 0, %s125
    %s129 = sphi 0, %s128
    %s145 = sphi 0, %s129
  $region4: #{netd_pixel_forward.1} parent=0 // loop_header_branch
    %13 = sbr.rel (%p11) target = $region8
  $region5: #{netd_pixel_forward.1} parent=0 // loop_body
    %s15 = ssub.s32 %s10, 1
    %s16 = ssub.s32 %s10, 2
    %s23 = sadd.s32 1, %s18
    %p24 = scmp.ge.s32.totalorder %s23, 1
    %s25 = scalar_select %p24, 0, %s23
    %s26 = sadd.s32 1, %s17
    %s27 = scalar_select %p24, %s26, %s17
    %p28 = scmp.ge.s32.totalorder %s27, 2
    %s29 = scalar_select %p28, 0, %s27
    %s30 = ssub.s32 %s17, %s29
    %s31 = ssub.s32 %s18, %s25
    %s32 = sor.u32 %s30, %s31
    %p33 = scmp.eq.s32.totalorder %s32, 0
    %s35 = sadd.s32 %s34, 1
    %s36 = scalar_select %p33, %s34, %s35
    %p39 = pneg %p33
    %p40 = scmp.eq.s32.totalorder %s10, 1
    %p41 = por %p39, %p40
    %p42 = scmp.ne.s32.totalorder %s34, %s37
    %p43 = scmp.eq.s32.totalorder %s10, 0
    %p44 = por %p42, %p43
    %p45 = scmp.ne.s32.totalorder %s34, %s37
    %p46 = scmp.eq.s32.totalorder %s15, 1
    %p47 = por %p45, %p46
    %p48 = scmp.ne.s32.totalorder %s37, %s38
    %p49 = scmp.eq.s32.totalorder %s15, 0
    %p50 = por %p48, %p49
    %p51 = scmp.ne.s32.totalorder %s37, %s38
    %p52 = scmp.eq.s32.totalorder %s16, 1
    %p53 = por %p51, %p52
    %p55 = scmp.ne.s32.totalorder %s38, %s54
    %p56 = scmp.eq.s32.totalorder %s16, 0
    %p57 = por %p55, %p56
    %s59 = sadd.s32 %s58, 1
    %p62 = scmp.eq.s32.totalorder %s10, 1
    %p63 = scmp.ne.s32.totalorder %s58, %s60
    %p64 = scmp.eq.s32.totalorder %s10, 0
    %p65 = por %p63, %p64
    %p66 = scmp.ne.s32.totalorder %s58, %s60
    %p67 = scmp.eq.s32.totalorder %s15, 1
    %p68 = por %p66, %p67
    %p69 = scmp.ne.s32.totalorder %s60, %s61
    %p70 = scmp.eq.s32.totalorder %s15, 0
    %p71 = por %p69, %p70
    %p72 = scmp.ne.s32.totalorder %s60, %s61
    %p73 = scmp.eq.s32.totalorder %s16, 1
    %p74 = por %p72, %p73
    %p76 = scmp.ne.s32.totalorder %s61, %s75
    %p77 = scmp.eq.s32.totalorder %s16, 0
    %p78 = por %p76, %p77
    %s80 = sadd.s32 %s79, 1
    %p83 = scmp.eq.s32.totalorder %s10, 1
    %p84 = scmp.ne.s32.totalorder %s79, %s81
    %p85 = scmp.eq.s32.totalorder %s10, 0
    %p86 = por %p84, %p85
    %p87 = scmp.ne.s32.totalorder %s79, %s81
    %p88 = scmp.eq.s32.totalorder %s15, 1
    %p89 = por %p87, %p88
    %p90 = scmp.ne.s32.totalorder %s81, %s82
    %p91 = scmp.eq.s32.totalorder %s15, 0
    %p92 = por %p90, %p91
    %p93 = scmp.ne.s32.totalorder %s81, %s82
    %p94 = scmp.eq.s32.totalorder %s16, 1
    %p95 = por %p93, %p94
    %p97 = scmp.ne.s32.totalorder %s82, %s96
    %p98 = scmp.eq.s32.totalorder %s16, 0
    %p99 = por %p97, %p98
    %s101 = sadd.s32 %s100, 1
    %p104 = scmp.eq.s32.totalorder %s10, 1
    %p105 = scmp.ne.s32.totalorder %s100, %s102
    %p106 = scmp.eq.s32.totalorder %s10, 0
    %p107 = por %p105, %p106
    %p108 = scmp.ne.s32.totalorder %s100, %s102
    %p109 = scmp.eq.s32.totalorder %s15, 1
    %p110 = por %p108, %p109
    %p111 = scmp.ne.s32.totalorder %s102, %s103
    %p112 = scmp.eq.s32.totalorder %s15, 0
    %p113 = por %p111, %p112
    %p114 = scmp.ne.s32.totalorder %s102, %s103
    %p115 = scmp.eq.s32.totalorder %s16, 1
    %p116 = por %p114, %p115
    %p118 = scmp.ne.s32.totalorder %s103, %s117
    %p119 = scmp.eq.s32.totalorder %s16, 0
    %p120 = por %p118, %p119
    %s121 = ssub.s32 %s17, %s29
    %s122 = ssub.s32 %s18, %s25
    %s123 = sor.u32 %s121, %s122
    %p124 = scmp.eq.s32.totalorder %s123, 0
    %s126 = sadd.s32 %s125, 1
    %s127 = scalar_select %p124, %s125, %s126
    %p130 = pneg %p124
    %p131 = scmp.eq.s32.totalorder %s10, 1
    %p132 = por %p130, %p131
    %p133 = scmp.ne.s32.totalorder %s125, %s128
    %p134 = scmp.eq.s32.totalorder %s10, 0
    %p135 = por %p133, %p134
    %p136 = scmp.ne.s32.totalorder %s125, %s128
    %p137 = scmp.eq.s32.totalorder %s15, 1
    %p138 = por %p136, %p137
    %p139 = scmp.ne.s32.totalorder %s128, %s129
    %p140 = scmp.eq.s32.totalorder %s15, 0
    %p141 = por %p139, %p140
    %p142 = scmp.ne.s32.totalorder %s128, %s129
    %p143 = scmp.eq.s32.totalorder %s16, 1
    %p144 = por %p142, %p143
    %p146 = scmp.ne.s32.totalorder %s129, %s145
    %p147 = scmp.eq.s32.totalorder %s16, 0
    %p148 = por %p146, %p147
    %p149 = scmp.le.s32.totalorder 1, %s10
    %p150 = scmp.lt.s32.totalorder %s10, 3
    %p151 = pnand %p149, %p150
    %p152 = pneg %p151
    // Predicated region
    $region9: #{netd_pixel_forward.1} parent=5 // pred_check
      _
    $region10: #{netd_pixel_forward.1} parent=5 // pred_check_branch
      %154 = sbr.rel (%p151) target = $region12
    $region11: #{netd_pixel_forward.1} parent=5 // pred_region
      %s155 = ssub.s32 %s10, 1
      // Predicated region
      $region13: #{netd_pixel_forward.1} parent=11 // pred_check
        %p156 = pneg %p71
      $region14: #{netd_pixel_forward.1} parent=11 // pred_check_branch
        %158 = sbr.rel (%p156) target = $region16
      $region15: #{netd_pixel_forward.1} parent=11 // pred_region
        _
      $region16: #{netd_pixel_forward.1} parent=11 // pred_fallthru
        _
      // Predicated region
      $region17: #{netd_pixel_forward.1} parent=11 // pred_check
        %p159 = pneg %p92
      $region18: #{netd_pixel_forward.1} parent=11 // pred_check_branch
        %161 = sbr.rel (%p159) target = $region20
      $region19: #{netd_pixel_forward.1} parent=11 // pred_region
        _
      $region20: #{netd_pixel_forward.1} parent=11 // pred_fallthru
        _
      // Predicated region
      $region21: #{netd_pixel_forward.1} parent=11 // pred_check
        %p162 = pneg %p113
      $region22: #{netd_pixel_forward.1} parent=11 // pred_check_branch
        %164 = sbr.rel (%p162) target = $region24
      $region23: #{netd_pixel_forward.1} parent=11 // pred_region
        _
      $region24: #{netd_pixel_forward.1} parent=11 // pred_fallthru
        _
    $region12: #{netd_pixel_forward.1} parent=5 // pred_fallthru
      _
    %p165 = scmp.lt.s32.totalorder %s10, 2
    // Predicated region
    $region25: #{netd_pixel_forward.1} parent=5 // pred_check
      %p166 = pneg %p165
    $region26: #{netd_pixel_forward.1} parent=5 // pred_check_branch
      %168 = sbr.rel (%p166) target = $region28
    $region27: #{netd_pixel_forward.1} parent=5 // pred_region
      // Predicated region
      $region29: #{netd_pixel_forward.1} parent=27 // pred_check
        %p169 = pneg %p44
      $region30: #{netd_pixel_forward.1} parent=27 // pred_check_branch
        %171 = sbr.rel (%p169) target = $region32
      $region31: #{netd_pixel_forward.1} parent=27 // pred_region
        %s172 = smul.u32 2, %s18
        %p173 = scmp.lt.s32.totalorder %s17, 1
        %s174 = scalar_select %p173, %s17, 1
        %p175 = scmp.lt.s32.totalorder %s172, 1
        %s176 = scalar_select %p175, %s172, 1
        %s177 = smul.addr %s174, 64
        %s178 = sadd.s32 %s176, %s177
        %s179 = smul.addr %s178, 4
        %s180 = scalar_lea.vmem %s0, %s179
        %s181 = smul.u32 2, %s18
      $region32: #{netd_pixel_forward.1} parent=27 // pred_fallthru
        _
    $region28: #{netd_pixel_forward.1} parent=5 // pred_fallthru
      _
    %p182 = scmp.le.s32.totalorder 1, %s10
    %p183 = scmp.lt.s32.totalorder %s10, 3
    %p184 = pnand %p182, %p183
    %p185 = pneg %p184
    // Predicated region
    $region33: #{netd_pixel_forward.1} parent=5 // pred_check
      _
    $region34: #{netd_pixel_forward.1} parent=5 // pred_check_branch
      %187 = sbr.rel (%p184) target = $region36
    $region35: #{netd_pixel_forward.1} parent=5 // pred_region
      %s188 = ssub.s32 %s10, 1
      %s189 = smul.u32 2, %s20
      %p190 = scmp.lt.s32.totalorder %s19, 1
      %s191 = scalar_select %p190, %s19, 1
      %p192 = scmp.lt.s32.totalorder %s189, 1
      %s193 = scalar_select %p192, %s189, 1
      %s194 = smul.addr %s191, 64
      %s195 = sadd.s32 %s193, %s194
      %s196 = smul.addr %s195, 4
      %s197 = scalar_lea.vmem %s0, %s196
      %p198 = pneg %p50
      %p199 = pneg %p47
      %p200 = pneg %p71
      %p201 = pneg %p68
      %p202 = pneg %p92
      %p203 = pneg %p89
      %p204 = pneg %p113
      %p205 = pneg %p110
      %p206 = pneg %p141
      %p207 = pneg %p138
      %s208 = smul.u32 2, %s20
      %p209 = scmp.lt.s32.totalorder %s19, 1
      %s210 = scalar_select %p209, %s19, 1
      %p211 = scmp.lt.s32.totalorder %s208, 1
      %s212 = scalar_select %p211, %s208, 1
      %s213 = smul.addr %s210, 2
      %s214 = sadd.s32 %s212, %s213
      %s215 = scalar_lea.vmem %s4, %s214
      %s216 = smul.u32 2, %s20
      %p217 = scmp.lt.s32.totalorder %s19, 1
      %s218 = scalar_select %p217, %s19, 1
      %p219 = scmp.lt.s32.totalorder %s216, 1
      %s220 = scalar_select %p219, %s216, 1
      %s221 = smul.addr %s218, 64
      %s222 = sadd.s32 %s220, %s221
      %s223 = smul.addr %s222, 4
      %s224 = scalar_lea.vmem %s0, %s223
      %s225 = smul.u32 2, %s20
      %s226 = smul.u32 2, %s20
      %p227 = scmp.lt.s32.totalorder %s19, 1
      %s228 = scalar_select %p227, %s19, 1
      %p229 = scmp.lt.s32.totalorder %s226, 1
      %s230 = scalar_select %p229, %s226, 1
      %s231 = smul.addr %s228, 2
      %s232 = sadd.s32 %s230, %s231
      %s233 = scalar_lea.vmem %s4, %s232
      %s234 = smul.u32 2, %s20
      %v236 = vld [vmem:[%s1] sm:$0xff]
      %v237 = vld [vmem:[%s1 + $0x8] sm:$0xff]
      %v238 = vld [vmem:[%s1 + $0x10] sm:$0xff]
      %v239 = vld [vmem:[%s1 + $0x18] sm:$0xff]
      %v240 = vld [vmem:[%s1 + $0x20] sm:$0xff]
      %v241 = vld [vmem:[%s1 + $0x28] sm:$0xff]
      %v242 = vld [vmem:[%s1 + $0x30] sm:$0xff]
      %v243 = vld [vmem:[%s1 + $0x38] sm:$0xff]
      %v244 = vld [vmem:[%s1 + $0x40] sm:$0xff]
      %v245 = vld [vmem:[%s1 + $0x48] sm:$0xff]
      %v246 = vld [vmem:[%s1 + $0x50] sm:$0xff]
      %v247 = vld [vmem:[%s1 + $0x58] sm:$0xff]
      %v248 = vld [vmem:[%s1 + $0x60] sm:$0xff]
      %v249 = vld [vmem:[%s1 + $0x68] sm:$0xff]
      %v250 = vld [vmem:[%s1 + $0x70] sm:$0xff]
      %v251 = vld [vmem:[%s1 + $0x78] sm:$0xff]
      %v252 = vld [vmem:[%s1 + $0x80] sm:$0xff]
      %v253 = vld [vmem:[%s1 + $0x88] sm:$0xff]
      %v254 = vld [vmem:[%s1 + $0x90] sm:$0xff]
      %v255 = vld [vmem:[%s1 + $0x98] sm:$0xff]
      %v256 = vld [vmem:[%s1 + $0xa0] sm:$0xff]
      %v257 = vld [vmem:[%s1 + $0xa8] sm:$0xff]
      %v258 = vld [vmem:[%s1 + $0xb0] sm:$0xff]
      %v259 = vld [vmem:[%s1 + $0xb8] sm:$0xff]
      %v260 = vld [vmem:[%s1 + $0xc0] sm:$0xff]
      %v261 = vld [vmem:[%s1 + $0xc8] sm:$0xff]
      %v262 = vld [vmem:[%s1 + $0xd0] sm:$0xff]
      %v263 = vld [vmem:[%s1 + $0xd8] sm:$0xff]
      %v264 = vld [vmem:[%s1 + $0xe0] sm:$0xff]
      %v265 = vld [vmem:[%s1 + $0xe8] sm:$0xff]
      %v266 = vld [vmem:[%s1 + $0xf0] sm:$0xff]
      %v267 = vld [vmem:[%s1 + $0xf8] sm:$0xff]
      %v268 = vld [vmem:[%s2] sm:$0xff]
      %v269 = vld [vmem:[%s2 + $0x8] sm:$0xff]
      %v270 = vld [vmem:[%s2 + $0x10] sm:$0xff]
      %v271 = vld [vmem:[%s2 + $0x18] sm:$0xff]
      %v272 = vld [vmem:[%s2 + $0x20] sm:$0xff]
      %v273 = vld [vmem:[%s2 + $0x28] sm:$0xff]
      %v274 = vld [vmem:[%s2 + $0x30] sm:$0xff]
      %v275 = vld [vmem:[%s2 + $0x38] sm:$0xff]
      %v276 = vld [vmem:[%s2 + $0x40] sm:$0xff]
      %v277 = vld [vmem:[%s2 + $0x48] sm:$0xff]
      %v278 = vld [vmem:[%s2 + $0x50] sm:$0xff]
      %v279 = vld [vmem:[%s2 + $0x58] sm:$0xff]
      %v280 = vld [vmem:[%s2 + $0x60] sm:$0xff]
      %v281 = vld [vmem:[%s2 + $0x68] sm:$0xff]
      %v282 = vld [vmem:[%s2 + $0x70] sm:$0xff]
      %v283 = vld [vmem:[%s2 + $0x78] sm:$0xff]
      %v284 = vld [vmem:[%s3] sm:$0x1]
      %v285 = vld [vmem:[%s224] sm:$0xff]
      %v286 = vld [vmem:[%s224 + $0x8] sm:$0xff]
      %v287 = vld [vmem:[%s224 + $0x10] sm:$0xff]
      %v288 = vld [vmem:[%s224 + $0x18] sm:$0xff]
      %v289 = vld [vmem:[%s224 + $0x20] sm:$0xff]
      %v290 = vld [vmem:[%s224 + $0x28] sm:$0xff]
      %v291 = vld [vmem:[%s224 + $0x30] sm:$0xff]
      %v292 = vld [vmem:[%s224 + $0x38] sm:$0xff]
      %v293 = vld [vmem:[%s224 + $0x40] sm:$0xff]
      %v294 = vld [vmem:[%s224 + $0x48] sm:$0xff]
      %v295 = vld [vmem:[%s224 + $0x50] sm:$0xff]
      %v296 = vld [vmem:[%s224 + $0x58] sm:$0xff]
      %v297 = vld [vmem:[%s224 + $0x60] sm:$0xff]
      %v298 = vld [vmem:[%s224 + $0x68] sm:$0xff]
      %v299 = vld [vmem:[%s224 + $0x70] sm:$0xff]
      %v300 = vld [vmem:[%s224 + $0x78] sm:$0xff]
      %v301 = vld [vmem:[%s224 + $0x80] sm:$0xff]
      %v302 = vld [vmem:[%s224 + $0x88] sm:$0xff]
      %v303 = vld [vmem:[%s224 + $0x90] sm:$0xff]
      %v304 = vld [vmem:[%s224 + $0x98] sm:$0xff]
      %v305 = vld [vmem:[%s224 + $0xa0] sm:$0xff]
      %v306 = vld [vmem:[%s224 + $0xa8] sm:$0xff]
      %v307 = vld [vmem:[%s224 + $0xb0] sm:$0xff]
      %v308 = vld [vmem:[%s224 + $0xb8] sm:$0xff]
      %v309 = vld [vmem:[%s224 + $0xc0] sm:$0xff]
      %v310 = vld [vmem:[%s224 + $0xc8] sm:$0xff]
      %v311 = vld [vmem:[%s224 + $0xd0] sm:$0xff]
      %v312 = vld [vmem:[%s224 + $0xd8] sm:$0xff]
      %v313 = vld [vmem:[%s224 + $0xe0] sm:$0xff]
      %v314 = vld [vmem:[%s224 + $0xe8] sm:$0xff]
      %v315 = vld [vmem:[%s224 + $0xf0] sm:$0xff]
      %v316 = vld [vmem:[%s224 + $0xf8] sm:$0xff]
      %v349 = vunpack.c.l.b16 %v236
      %v350 = vunpack.c.h.b16 %v236
      %v351 = vunpack.c.l.b16 %v237
      %v352 = vunpack.c.h.b16 %v237
      %v353 = vunpack.c.l.b16 %v238
      %v354 = vunpack.c.h.b16 %v238
      %v355 = vunpack.c.l.b16 %v239
      %v356 = vunpack.c.h.b16 %v239
      %v357 = vunpack.c.l.b16 %v240
      %v358 = vunpack.c.h.b16 %v240
      %v359 = vunpack.c.l.b16 %v241
      %v360 = vunpack.c.h.b16 %v241
      %v361 = vunpack.c.l.b16 %v242
      %v362 = vunpack.c.h.b16 %v242
      %v363 = vunpack.c.l.b16 %v243
      %v364 = vunpack.c.h.b16 %v243
      %v365 = vunpack.c.l.b16 %v244
      %v366 = vunpack.c.h.b16 %v244
      %v367 = vunpack.c.l.b16 %v245
      %v368 = vunpack.c.h.b16 %v245
      %v369 = vunpack.c.l.b16 %v246
      %v370 = vunpack.c.h.b16 %v246
      %v371 = vunpack.c.l.b16 %v247
      %v372 = vunpack.c.h.b16 %v247
      %v373 = vunpack.c.l.b16 %v248
      %v374 = vunpack.c.h.b16 %v248
      %v375 = vunpack.c.l.b16 %v249
      %v376 = vunpack.c.h.b16 %v249
      %v377 = vunpack.c.l.b16 %v250
      %v378 = vunpack.c.h.b16 %v250
      %v379 = vunpack.c.l.b16 %v251
      %v380 = vunpack.c.h.b16 %v251
      %v381 = vunpack.c.l.b16 %v252
      %v382 = vunpack.c.h.b16 %v252
      %v383 = vunpack.c.l.b16 %v253
      %v384 = vunpack.c.h.b16 %v253
      %v385 = vunpack.c.l.b16 %v254
      %v386 = vunpack.c.h.b16 %v254
      %v387 = vunpack.c.l.b16 %v255
      %v388 = vunpack.c.h.b16 %v255
      %v389 = vunpack.c.l.b16 %v256
      %v390 = vunpack.c.h.b16 %v256
      %v391 = vunpack.c.l.b16 %v257
      %v392 = vunpack.c.h.b16 %v257
      %v393 = vunpack.c.l.b16 %v258
      %v394 = vunpack.c.h.b16 %v258
      %v395 = vunpack.c.l.b16 %v259
      %v396 = vunpack.c.h.b16 %v259
      %v397 = vunpack.c.l.b16 %v260
      %v398 = vunpack.c.h.b16 %v260
      %v399 = vunpack.c.l.b16 %v261
      %v400 = vunpack.c.h.b16 %v261
      %v401 = vunpack.c.l.b16 %v262
      %v402 = vunpack.c.h.b16 %v262
      %v403 = vunpack.c.l.b16 %v263
      %v404 = vunpack.c.h.b16 %v263
      %v405 = vunpack.c.l.b16 %v264
      %v406 = vunpack.c.h.b16 %v264
      %v407 = vunpack.c.l.b16 %v265
      %v408 = vunpack.c.h.b16 %v265
      %v409 = vunpack.c.l.b16 %v266
      %v410 = vunpack.c.h.b16 %v266
      %v411 = vunpack.c.l.b16 %v267
      %v412 = vunpack.c.h.b16 %v267
      %v413 = vpack.c.b16 %v351, %v349
      %v414 = vpack.c.b16 %v352, %v350
      %v415 = vpack.c.b16 %v355, %v353
      %v416 = vpack.c.b16 %v356, %v354
      %v417 = vpack.c.b16 %v359, %v357
      %v418 = vpack.c.b16 %v360, %v358
      %v419 = vpack.c.b16 %v363, %v361
      %v420 = vpack.c.b16 %v364, %v362
      %v421 = vpack.c.b16 %v367, %v365
      %v422 = vpack.c.b16 %v368, %v366
      %v423 = vpack.c.b16 %v371, %v369
      %v424 = vpack.c.b16 %v372, %v370
      %v425 = vpack.c.b16 %v375, %v373
      %v426 = vpack.c.b16 %v376, %v374
      %v427 = vpack.c.b16 %v379, %v377
      %v428 = vpack.c.b16 %v380, %v378
      %v429 = vpack.c.b16 %v383, %v381
      %v430 = vpack.c.b16 %v384, %v382
      %v431 = vpack.c.b16 %v387, %v385
      %v432 = vpack.c.b16 %v388, %v386
      %v433 = vpack.c.b16 %v391, %v389
      %v434 = vpack.c.b16 %v392, %v390
      %v435 = vpack.c.b16 %v395, %v393
      %v436 = vpack.c.b16 %v396, %v394
      %v437 = vpack.c.b16 %v399, %v397
      %v438 = vpack.c.b16 %v400, %v398
      %v439 = vpack.c.b16 %v403, %v401
      %v440 = vpack.c.b16 %v404, %v402
      %v441 = vpack.c.b16 %v407, %v405
      %v442 = vpack.c.b16 %v408, %v406
      %v443 = vpack.c.b16 %v411, %v409
      %v444 = vpack.c.b16 %v412, %v410
      %v509 = vunpack.c.l.b16 %v285
      %v510 = vunpack.c.h.b16 %v285
      %v511 = vunpack.c.l.b16 %v286
      %v512 = vunpack.c.h.b16 %v286
      %v513 = vunpack.c.l.b16 %v287
      %v514 = vunpack.c.h.b16 %v287
      %v515 = vunpack.c.l.b16 %v288
      %v516 = vunpack.c.h.b16 %v288
      %v517 = vunpack.c.l.b16 %v289
      %v518 = vunpack.c.h.b16 %v289
      %v519 = vunpack.c.l.b16 %v290
      %v520 = vunpack.c.h.b16 %v290
      %v521 = vunpack.c.l.b16 %v291
      %v522 = vunpack.c.h.b16 %v291
      %v523 = vunpack.c.l.b16 %v292
      %v524 = vunpack.c.h.b16 %v292
      %v525 = vunpack.c.l.b16 %v293
      %v526 = vunpack.c.h.b16 %v293
      %v527 = vunpack.c.l.b16 %v294
      %v528 = vunpack.c.h.b16 %v294
      %v529 = vunpack.c.l.b16 %v295
      %v530 = vunpack.c.h.b16 %v295
      %v531 = vunpack.c.l.b16 %v296
      %v532 = vunpack.c.h.b16 %v296
      %v533 = vunpack.c.l.b16 %v297
      %v534 = vunpack.c.h.b16 %v297
      %v535 = vunpack.c.l.b16 %v298
      %v536 = vunpack.c.h.b16 %v298
      %v537 = vunpack.c.l.b16 %v299
      %v538 = vunpack.c.h.b16 %v299
      %v539 = vunpack.c.l.b16 %v300
      %v540 = vunpack.c.h.b16 %v300
      %v541 = vunpack.c.l.b16 %v301
      %v542 = vunpack.c.h.b16 %v301
      %v543 = vunpack.c.l.b16 %v302
      %v544 = vunpack.c.h.b16 %v302
      %v545 = vunpack.c.l.b16 %v303
      %v546 = vunpack.c.h.b16 %v303
      %v547 = vunpack.c.l.b16 %v304
      %v548 = vunpack.c.h.b16 %v304
      %v549 = vunpack.c.l.b16 %v305
      %v550 = vunpack.c.h.b16 %v305
      %v551 = vunpack.c.l.b16 %v306
      %v552 = vunpack.c.h.b16 %v306
      %v553 = vunpack.c.l.b16 %v307
      %v554 = vunpack.c.h.b16 %v307
      %v555 = vunpack.c.l.b16 %v308
      %v556 = vunpack.c.h.b16 %v308
      %v557 = vunpack.c.l.b16 %v309
      %v558 = vunpack.c.h.b16 %v309
      %v559 = vunpack.c.l.b16 %v310
      %v560 = vunpack.c.h.b16 %v310
      %v561 = vunpack.c.l.b16 %v311
      %v562 = vunpack.c.h.b16 %v311
      %v563 = vunpack.c.l.b16 %v312
      %v564 = vunpack.c.h.b16 %v312
      %v565 = vunpack.c.l.b16 %v313
      %v566 = vunpack.c.h.b16 %v313
      %v567 = vunpack.c.l.b16 %v314
      %v568 = vunpack.c.h.b16 %v314
      %v569 = vunpack.c.l.b16 %v315
      %v570 = vunpack.c.h.b16 %v315
      %v571 = vunpack.c.l.b16 %v316
      %v572 = vunpack.c.h.b16 %v316
      %v573 = vpack.c.b16 %v511, %v509
      %v574 = vpack.c.b16 %v512, %v510
      %v575 = vpack.c.b16 %v515, %v513
      %v576 = vpack.c.b16 %v516, %v514
      %v577 = vpack.c.b16 %v519, %v517
      %v578 = vpack.c.b16 %v520, %v518
      %v579 = vpack.c.b16 %v523, %v521
      %v580 = vpack.c.b16 %v524, %v522
      %v581 = vpack.c.b16 %v527, %v525
      %v582 = vpack.c.b16 %v528, %v526
      %v583 = vpack.c.b16 %v531, %v529
      %v584 = vpack.c.b16 %v532, %v530
      %v585 = vpack.c.b16 %v535, %v533
      %v586 = vpack.c.b16 %v536, %v534
      %v587 = vpack.c.b16 %v539, %v537
      %v588 = vpack.c.b16 %v540, %v538
      %v589 = vpack.c.b16 %v543, %v541
      %v590 = vpack.c.b16 %v544, %v542
      %v591 = vpack.c.b16 %v547, %v545
      %v592 = vpack.c.b16 %v548, %v546
      %v593 = vpack.c.b16 %v551, %v549
      %v594 = vpack.c.b16 %v552, %v550
      %v595 = vpack.c.b16 %v555, %v553
      %v596 = vpack.c.b16 %v556, %v554
      %v597 = vpack.c.b16 %v559, %v557
      %v598 = vpack.c.b16 %v560, %v558
      %v599 = vpack.c.b16 %v563, %v561
      %v600 = vpack.c.b16 %v564, %v562
      %v601 = vpack.c.b16 %v567, %v565
      %v602 = vpack.c.b16 %v568, %v566
      %v603 = vpack.c.b16 %v571, %v569
      %v604 = vpack.c.b16 %v572, %v570
      %637 = vmatprep.subr.bf16.mxu0 %v574
      %638 = vmatpush1.bf16.msra.mxu0 %v573
      %639 = vmatprep.subr.bf16.mxu0 %v576
      %640 = vmatpush1.bf16.msra.mxu0 %v575
      %641 = vmatprep.subr.bf16.mxu0 %v578
      %642 = vmatpush1.bf16.msra.mxu0 %v577
      %643 = vmatprep.subr.bf16.mxu0 %v580
      %644 = vmatpush1.bf16.msra.mxu0 %v579
      %645 = vmatprep.subr.bf16.mxu0 %v582
      %646 = vmatpush1.bf16.msra.mxu0 %v581
      %647 = vmatprep.subr.bf16.mxu0 %v584
      %648 = vmatpush1.bf16.msra.mxu0 %v583
      %649 = vmatprep.subr.bf16.mxu0 %v586
      %650 = vmatpush1.bf16.msra.mxu0 %v585
      %651 = vmatprep.subr.bf16.mxu0 %v588
      %652 = vmatpush1.bf16.msra.mxu0 %v587
      %653 = vmatprep.subr.bf16.mxu0 %v590
      %654 = vmatpush1.bf16.msra.mxu0 %v589
      %655 = vmatprep.subr.bf16.mxu0 %v592
      %656 = vmatpush1.bf16.msra.mxu0 %v591
      %657 = vmatprep.subr.bf16.mxu0 %v594
      %658 = vmatpush1.bf16.msra.mxu0 %v593
      %659 = vmatprep.subr.bf16.mxu0 %v596
      %660 = vmatpush1.bf16.msra.mxu0 %v595
      %661 = vmatprep.subr.bf16.mxu0 %v598
      %662 = vmatpush1.bf16.msra.mxu0 %v597
      %663 = vmatprep.subr.bf16.mxu0 %v600
      %664 = vmatpush1.bf16.msra.mxu0 %v599
      %665 = vmatprep.subr.bf16.mxu0 %v602
      %666 = vmatpush1.bf16.msra.mxu0 %v601
      %667 = vmatprep.subr.bf16.mxu0 %v604
      %668 = vmatpush1.bf16.msra.mxu0 %v603
      %669 = vmatprep.mubr.bf16.mxu0 %v414
      %670 = vmatmul.mubr.bf16.gmra.mrb[0].mxu0 %v413
      %v671 = vpop.f32.mrb[0].mxu0
      %v672 = vadd.f32 0.0, %v671
      %v673 = vpop.f32.mrb[0].mxu0
      %v674 = vadd.f32 0.0, %v673
      %v675 = vpop.f32.mrb[0].mxu0
      %v676 = vadd.f32 0.0, %v675
      %v677 = vpop.f32.mrb[0].mxu0
      %v678 = vadd.f32 0.0, %v677
      %679 = vmatprep.mubr.bf16.mxu0 %v416
      %680 = vmatmul.mubr.bf16.gmra.mrb[0].mxu0 %v415
      %v681 = vpop.f32.mrb[0].mxu0
      %v682 = vadd.f32 0.0, %v681
      %v683 = vpop.f32.mrb[0].mxu0
      %v684 = vadd.f32 0.0, %v683
      %v685 = vpop.f32.mrb[0].mxu0
      %v686 = vadd.f32 0.0, %v685
      %v687 = vpop.f32.mrb[0].mxu0
      %v688 = vadd.f32 0.0, %v687
      %689 = vmatprep.mubr.bf16.mxu0 %v418
      %690 = vmatmul.mubr.bf16.gmra.mrb[0].mxu0 %v417
      %v691 = vpop.f32.mrb[0].mxu0
      %v692 = vadd.f32 0.0, %v691
      %v693 = vpop.f32.mrb[0].mxu0
      %v694 = vadd.f32 0.0, %v693
      %v695 = vpop.f32.mrb[0].mxu0
      %v696 = vadd.f32 0.0, %v695
      %v697 = vpop.f32.mrb[0].mxu0
      %v698 = vadd.f32 0.0, %v697
      %699 = vmatprep.mubr.bf16.mxu0 %v420
      %700 = vmatmul.mubr.bf16.gmra.mrb[0].mxu0 %v419
      %v701 = vpop.f32.mrb[0].mxu0
      %v702 = vadd.f32 0.0, %v701
      %v703 = vpop.f32.mrb[0].mxu0
      %v704 = vadd.f32 0.0, %v703
      %v705 = vpop.f32.mrb[0].mxu0
      %v706 = vadd.f32 0.0, %v705
      %v707 = vpop.f32.mrb[0].mxu0
      %v708 = vadd.f32 0.0, %v707
      %709 = vmatprep.mubr.bf16.mxu0 %v422
      %710 = vmatmul.mubr.bf16.gmra.mrb[0].mxu0 %v421
      %v711 = vpop.f32.mrb[0].mxu0
      %v712 = vadd.f32 0.0, %v711
      %v713 = vpop.f32.mrb[0].mxu0
      %v714 = vadd.f32 0.0, %v713
      %v715 = vpop.f32.mrb[0].mxu0
      %v716 = vadd.f32 0.0, %v715
      %v717 = vpop.f32.mrb[0].mxu0
      %v718 = vadd.f32 0.0, %v717
      %719 = vmatprep.mubr.bf16.mxu0 %v424
      %720 = vmatmul.mubr.bf16.gmra.mrb[0].mxu0 %v423
      %v721 = vpop.f32.mrb[0].mxu0
      %v722 = vadd.f32 0.0, %v721
      %v723 = vpop.f32.mrb[0].mxu0
      %v724 = vadd.f32 0.0, %v723
      %v725 = vpop.f32.mrb[0].mxu0
      %v726 = vadd.f32 0.0, %v725
      %v727 = vpop.f32.mrb[0].mxu0
      %v728 = vadd.f32 0.0, %v727
      %729 = vmatprep.mubr.bf16.mxu0 %v426
      %730 = vmatmul.mubr.bf16.gmra.mrb[0].mxu0 %v425
      %v731 = vpop.f32.mrb[0].mxu0
      %v732 = vadd.f32 0.0, %v731
      %v733 = vpop.f32.mrb[0].mxu0
      %v734 = vadd.f32 0.0, %v733
      %v735 = vpop.f32.mrb[0].mxu0
      %v736 = vadd.f32 0.0, %v735
      %v737 = vpop.f32.mrb[0].mxu0
      %v738 = vadd.f32 0.0, %v737
      %739 = vmatprep.mubr.bf16.mxu0 %v428
      %740 = vmatmul.mubr.bf16.gmra.mrb[0].mxu0 %v427
      %v741 = vpop.f32.mrb[0].mxu0
      %v742 = vadd.f32 0.0, %v741
      %v743 = vpop.f32.mrb[0].mxu0
      %v744 = vadd.f32 0.0, %v743
      %v745 = vpop.f32.mrb[0].mxu0
      %v746 = vadd.f32 0.0, %v745
      %v747 = vpop.f32.mrb[0].mxu0
      %v748 = vadd.f32 0.0, %v747
      %749 = vmatprep.mubr.bf16.mxu0 %v430
      %750 = vmatmul.mubr.bf16.gmra.mrb[0].mxu0 %v429
      %v751 = vpop.f32.mrb[0].mxu0
      %v752 = vadd.f32 0.0, %v751
      %v753 = vpop.f32.mrb[0].mxu0
      %v754 = vadd.f32 0.0, %v753
      %v755 = vpop.f32.mrb[0].mxu0
      %v756 = vadd.f32 0.0, %v755
      %v757 = vpop.f32.mrb[0].mxu0
      %v758 = vadd.f32 0.0, %v757
      %759 = vmatprep.mubr.bf16.mxu0 %v432
      %760 = vmatmul.mubr.bf16.gmra.mrb[0].mxu0 %v431
      %v761 = vpop.f32.mrb[0].mxu0
      %v762 = vadd.f32 0.0, %v761
      %v763 = vpop.f32.mrb[0].mxu0
      %v764 = vadd.f32 0.0, %v763
      %v765 = vpop.f32.mrb[0].mxu0
      %v766 = vadd.f32 0.0, %v765
      %v767 = vpop.f32.mrb[0].mxu0
      %v768 = vadd.f32 0.0, %v767
      %769 = vmatprep.mubr.bf16.mxu0 %v434
      %770 = vmatmul.mubr.bf16.gmra.mrb[0].mxu0 %v433
      %v771 = vpop.f32.mrb[0].mxu0
      %v772 = vadd.f32 0.0, %v771
      %v773 = vpop.f32.mrb[0].mxu0
      %v774 = vadd.f32 0.0, %v773
      %v775 = vpop.f32.mrb[0].mxu0
      %v776 = vadd.f32 0.0, %v775
      %v777 = vpop.f32.mrb[0].mxu0
      %v778 = vadd.f32 0.0, %v777
      %779 = vmatprep.mubr.bf16.mxu0 %v436
      %780 = vmatmul.mubr.bf16.gmra.mrb[0].mxu0 %v435
      %v781 = vpop.f32.mrb[0].mxu0
      %v782 = vadd.f32 0.0, %v781
      %v783 = vpop.f32.mrb[0].mxu0
      %v784 = vadd.f32 0.0, %v783
      %v785 = vpop.f32.mrb[0].mxu0
      %v786 = vadd.f32 0.0, %v785
      %v787 = vpop.f32.mrb[0].mxu0
      %v788 = vadd.f32 0.0, %v787
      %789 = vmatprep.mubr.bf16.mxu0 %v438
      %790 = vmatmul.mubr.bf16.gmra.mrb[0].mxu0 %v437
      %v791 = vpop.f32.mrb[0].mxu0
      %v792 = vadd.f32 0.0, %v791
      %v793 = vpop.f32.mrb[0].mxu0
      %v794 = vadd.f32 0.0, %v793
      %v795 = vpop.f32.mrb[0].mxu0
      %v796 = vadd.f32 0.0, %v795
      %v797 = vpop.f32.mrb[0].mxu0
      %v798 = vadd.f32 0.0, %v797
      %799 = vmatprep.mubr.bf16.mxu0 %v440
      %800 = vmatmul.mubr.bf16.gmra.mrb[0].mxu0 %v439
      %v801 = vpop.f32.mrb[0].mxu0
      %v802 = vadd.f32 0.0, %v801
      %v803 = vpop.f32.mrb[0].mxu0
      %v804 = vadd.f32 0.0, %v803
      %v805 = vpop.f32.mrb[0].mxu0
      %v806 = vadd.f32 0.0, %v805
      %v807 = vpop.f32.mrb[0].mxu0
      %v808 = vadd.f32 0.0, %v807
      %809 = vmatprep.mubr.bf16.mxu0 %v442
      %810 = vmatmul.mubr.bf16.gmra.mrb[0].mxu0 %v441
      %v811 = vpop.f32.mrb[0].mxu0
      %v812 = vadd.f32 0.0, %v811
      %v813 = vpop.f32.mrb[0].mxu0
      %v814 = vadd.f32 0.0, %v813
      %v815 = vpop.f32.mrb[0].mxu0
      %v816 = vadd.f32 0.0, %v815
      %v817 = vpop.f32.mrb[0].mxu0
      %v818 = vadd.f32 0.0, %v817
      %819 = vmatprep.mubr.bf16.mxu0 %v444
      %820 = vmatmul.mubr.bf16.gmra.mrb[0].mxu0 %v443
      %v821 = vpop.f32.mrb[0].mxu0
      %v822 = vadd.f32 0.0, %v821
      %v823 = vpop.f32.mrb[0].mxu0
      %v824 = vadd.f32 0.0, %v823
      %v825 = vpop.f32.mrb[0].mxu0
      %v826 = vadd.f32 0.0, %v825
      %v827 = vpop.f32.mrb[0].mxu0
      %v828 = vadd.f32 0.0, %v827
      %829 = vdwg.mxu0
      %v830 = vmax.f32 %v672, 0.0
      %v831 = vmax.f32 %v674, 0.0
      %v832 = vmax.f32 %v676, 0.0
      %v833 = vmax.f32 %v678, 0.0
      %v834 = vmax.f32 %v682, 0.0
      %v835 = vmax.f32 %v684, 0.0
      %v836 = vmax.f32 %v686, 0.0
      %v837 = vmax.f32 %v688, 0.0
      %v838 = vmax.f32 %v692, 0.0
      %v839 = vmax.f32 %v694, 0.0
      %v840 = vmax.f32 %v696, 0.0
      %v841 = vmax.f32 %v698, 0.0
      %v842 = vmax.f32 %v702, 0.0
      %v843 = vmax.f32 %v704, 0.0
      %v844 = vmax.f32 %v706, 0.0
      %v845 = vmax.f32 %v708, 0.0
      %v846 = vmax.f32 %v712, 0.0
      %v847 = vmax.f32 %v714, 0.0
      %v848 = vmax.f32 %v716, 0.0
      %v849 = vmax.f32 %v718, 0.0
      %v850 = vmax.f32 %v722, 0.0
      %v851 = vmax.f32 %v724, 0.0
      %v852 = vmax.f32 %v726, 0.0
      %v853 = vmax.f32 %v728, 0.0
      %v854 = vmax.f32 %v732, 0.0
      %v855 = vmax.f32 %v734, 0.0
      %v856 = vmax.f32 %v736, 0.0
      %v857 = vmax.f32 %v738, 0.0
      %v858 = vmax.f32 %v742, 0.0
      %v859 = vmax.f32 %v744, 0.0
      %v860 = vmax.f32 %v746, 0.0
      %v861 = vmax.f32 %v748, 0.0
      %v862 = vmax.f32 %v752, 0.0
      %v863 = vmax.f32 %v754, 0.0
      %v864 = vmax.f32 %v756, 0.0
      %v865 = vmax.f32 %v758, 0.0
      %v866 = vmax.f32 %v762, 0.0
      %v867 = vmax.f32 %v764, 0.0
      %v868 = vmax.f32 %v766, 0.0
      %v869 = vmax.f32 %v768, 0.0
      %v870 = vmax.f32 %v772, 0.0
      %v871 = vmax.f32 %v774, 0.0
      %v872 = vmax.f32 %v776, 0.0
      %v873 = vmax.f32 %v778, 0.0
      %v874 = vmax.f32 %v782, 0.0
      %v875 = vmax.f32 %v784, 0.0
      %v876 = vmax.f32 %v786, 0.0
      %v877 = vmax.f32 %v788, 0.0
      %v878 = vmax.f32 %v792, 0.0
      %v879 = vmax.f32 %v794, 0.0
      %v880 = vmax.f32 %v796, 0.0
      %v881 = vmax.f32 %v798, 0.0
      %v882 = vmax.f32 %v802, 0.0
      %v883 = vmax.f32 %v804, 0.0
      %v884 = vmax.f32 %v806, 0.0
      %v885 = vmax.f32 %v808, 0.0
      %v886 = vmax.f32 %v812, 0.0
      %v887 = vmax.f32 %v814, 0.0
      %v888 = vmax.f32 %v816, 0.0
      %v889 = vmax.f32 %v818, 0.0
      %v890 = vmax.f32 %v822, 0.0
      %v891 = vmax.f32 %v824, 0.0
      %v892 = vmax.f32 %v826, 0.0
      %v893 = vmax.f32 %v828, 0.0
      %v894 = vpack.c.bf16 %v832, %v830
      %v895 = vpack.c.bf16 %v833, %v831
      %v896 = vpack.c.bf16 %v836, %v834
      %v897 = vpack.c.bf16 %v837, %v835
      %v898 = vpack.c.bf16 %v840, %v838
      %v899 = vpack.c.bf16 %v841, %v839
      %v900 = vpack.c.bf16 %v844, %v842
      %v901 = vpack.c.bf16 %v845, %v843
      %v902 = vpack.c.bf16 %v848, %v846
      %v903 = vpack.c.bf16 %v849, %v847
      %v904 = vpack.c.bf16 %v852, %v850
      %v905 = vpack.c.bf16 %v853, %v851
      %v906 = vpack.c.bf16 %v856, %v854
      %v907 = vpack.c.bf16 %v857, %v855
      %v908 = vpack.c.bf16 %v860, %v858
      %v909 = vpack.c.bf16 %v861, %v859
      %v910 = vpack.c.bf16 %v864, %v862
      %v911 = vpack.c.bf16 %v865, %v863
      %v912 = vpack.c.bf16 %v868, %v866
      %v913 = vpack.c.bf16 %v869, %v867
      %v914 = vpack.c.bf16 %v872, %v870
      %v915 = vpack.c.bf16 %v873, %v871
      %v916 = vpack.c.bf16 %v876, %v874
      %v917 = vpack.c.bf16 %v877, %v875
      %v918 = vpack.c.bf16 %v880, %v878
      %v919 = vpack.c.bf16 %v881, %v879
      %v920 = vpack.c.bf16 %v884, %v882
      %v921 = vpack.c.bf16 %v885, %v883
      %v922 = vpack.c.bf16 %v888, %v886
      %v923 = vpack.c.bf16 %v889, %v887
      %v924 = vpack.c.bf16 %v892, %v890
      %v925 = vpack.c.bf16 %v893, %v891
      %v942 = vunpack.c.l.b16 %v268
      %v943 = vunpack.c.h.b16 %v268
      %v944 = vunpack.c.l.b16 %v269
      %v945 = vunpack.c.h.b16 %v269
      %v946 = vunpack.c.l.b16 %v270
      %v947 = vunpack.c.h.b16 %v270
      %v948 = vunpack.c.l.b16 %v271
      %v949 = vunpack.c.h.b16 %v271
      %v950 = vunpack.c.l.b16 %v272
      %v951 = vunpack.c.h.b16 %v272
      %v952 = vunpack.c.l.b16 %v273
      %v953 = vunpack.c.h.b16 %v273
      %v954 = vunpack.c.l.b16 %v274
      %v955 = vunpack.c.h.b16 %v274
      %v956 = vunpack.c.l.b16 %v275
      %v957 = vunpack.c.h.b16 %v275
      %v958 = vunpack.c.l.b16 %v276
      %v959 = vunpack.c.h.b16 %v276
      %v960 = vunpack.c.l.b16 %v277
      %v961 = vunpack.c.h.b16 %v277
      %v962 = vunpack.c.l.b16 %v278
      %v963 = vunpack.c.h.b16 %v278
      %v964 = vunpack.c.l.b16 %v279
      %v965 = vunpack.c.h.b16 %v279
      %v966 = vunpack.c.l.b16 %v280
      %v967 = vunpack.c.h.b16 %v280
      %v968 = vunpack.c.l.b16 %v281
      %v969 = vunpack.c.h.b16 %v281
      %v970 = vunpack.c.l.b16 %v282
      %v971 = vunpack.c.h.b16 %v282
      %v972 = vunpack.c.l.b16 %v283
      %v973 = vunpack.c.h.b16 %v283
      %v974 = vpack.c.b16 %v944, %v942
      %v975 = vpack.c.b16 %v945, %v943
      %v976 = vpack.c.b16 %v948, %v946
      %v977 = vpack.c.b16 %v949, %v947
      %v978 = vpack.c.b16 %v952, %v950
      %v979 = vpack.c.b16 %v953, %v951
      %v980 = vpack.c.b16 %v956, %v954
      %v981 = vpack.c.b16 %v957, %v955
      %v982 = vpack.c.b16 %v960, %v958
      %v983 = vpack.c.b16 %v961, %v959
      %v984 = vpack.c.b16 %v964, %v962
      %v985 = vpack.c.b16 %v965, %v963
      %v986 = vpack.c.b16 %v968, %v966
      %v987 = vpack.c.b16 %v969, %v967
      %v988 = vpack.c.b16 %v972, %v970
      %v989 = vpack.c.b16 %v973, %v971
      %1006 = vmatprep.subr.bf16.mxu0 %v895
      %1007 = vmatpush1.bf16.msra.mxu0 %v894
      %1008 = vmatprep.subr.bf16.mxu0 %v897
      %1009 = vmatpush1.bf16.msra.mxu0 %v896
      %1010 = vmatprep.subr.bf16.mxu0 %v899
      %1011 = vmatpush1.bf16.msra.mxu0 %v898
      %1012 = vmatprep.subr.bf16.mxu0 %v901
      %1013 = vmatpush1.bf16.msra.mxu0 %v900
      %1014 = vmatprep.subr.bf16.mxu0 %v903
      %1015 = vmatpush1.bf16.msra.mxu0 %v902
      %1016 = vmatprep.subr.bf16.mxu0 %v905
      %1017 = vmatpush1.bf16.msra.mxu0 %v904
      %1018 = vmatprep.subr.bf16.mxu0 %v907
      %1019 = vmatpush1.bf16.msra.mxu0 %v906
      %1020 = vmatprep.subr.bf16.mxu0 %v909
      %1021 = vmatpush1.bf16.msra.mxu0 %v908
      %1022 = vmatprep.subr.bf16.mxu0 %v911
      %1023 = vmatpush1.bf16.msra.mxu0 %v910
      %1024 = vmatprep.subr.bf16.mxu0 %v913
      %1025 = vmatpush1.bf16.msra.mxu0 %v912
      %1026 = vmatprep.subr.bf16.mxu0 %v915
      %1027 = vmatpush1.bf16.msra.mxu0 %v914
      %1028 = vmatprep.subr.bf16.mxu0 %v917
      %1029 = vmatpush1.bf16.msra.mxu0 %v916
      %1030 = vmatprep.subr.bf16.mxu0 %v919
      %1031 = vmatpush1.bf16.msra.mxu0 %v918
      %1032 = vmatprep.subr.bf16.mxu0 %v921
      %1033 = vmatpush1.bf16.msra.mxu0 %v920
      %1034 = vmatprep.subr.bf16.mxu0 %v923
      %1035 = vmatpush1.bf16.msra.mxu0 %v922
      %1036 = vmatprep.subr.bf16.mxu0 %v925
      %1037 = vmatpush1.bf16.msra.mxu0 %v924
      %1038 = vmatprep.mubr.bf16.mxu0 %v975
      %1039 = vmatmul.mubr.bf16.gmra.mrb[0].mxu0 %v974
      %v1040 = vpop.f32.mrb[0].mxu0
      %v1041 = vadd.f32 0.0, %v1040
      %v1042 = vpop.f32.mrb[0].mxu0
      %v1043 = vadd.f32 0.0, %v1042
      %v1044 = vpop.f32.mrb[0].mxu0
      %v1045 = vadd.f32 0.0, %v1044
      %v1046 = vpop.f32.mrb[0].mxu0
      %v1047 = vadd.f32 0.0, %v1046
      %1048 = vmatprep.mubr.bf16.mxu0 %v977
      %1049 = vmatmul.mubr.bf16.gmra.mrb[0].mxu0 %v976
      %v1050 = vpop.f32.mrb[0].mxu0
      %v1051 = vadd.f32 0.0, %v1050
      %v1052 = vpop.f32.mrb[0].mxu0
      %v1053 = vadd.f32 0.0, %v1052
      %v1054 = vpop.f32.mrb[0].mxu0
      %v1055 = vadd.f32 0.0, %v1054
      %v1056 = vpop.f32.mrb[0].mxu0
      %v1057 = vadd.f32 0.0, %v1056
      %1058 = vmatprep.mubr.bf16.mxu0 %v979
      %1059 = vmatmul.mubr.bf16.gmra.mrb[0].mxu0 %v978
      %v1060 = vpop.f32.mrb[0].mxu0
      %v1061 = vadd.f32 0.0, %v1060
      %v1062 = vpop.f32.mrb[0].mxu0
      %v1063 = vadd.f32 0.0, %v1062
      %v1064 = vpop.f32.mrb[0].mxu0
      %v1065 = vadd.f32 0.0, %v1064
      %v1066 = vpop.f32.mrb[0].mxu0
      %v1067 = vadd.f32 0.0, %v1066
      %1068 = vmatprep.mubr.bf16.mxu0 %v981
      %1069 = vmatmul.mubr.bf16.gmra.mrb[0].mxu0 %v980
      %v1070 = vpop.f32.mrb[0].mxu0
      %v1071 = vadd.f32 0.0, %v1070
      %v1072 = vpop.f32.mrb[0].mxu0
      %v1073 = vadd.f32 0.0, %v1072
      %v1074 = vpop.f32.mrb[0].mxu0
      %v1075 = vadd.f32 0.0, %v1074
      %v1076 = vpop.f32.mrb[0].mxu0
      %v1077 = vadd.f32 0.0, %v1076
      %1078 = vmatprep.mubr.bf16.mxu0 %v983
      %1079 = vmatmul.mubr.bf16.gmra.mrb[0].mxu0 %v982
      %v1080 = vpop.f32.mrb[0].mxu0
      %v1081 = vadd.f32 0.0, %v1080
      %v1082 = vpop.f32.mrb[0].mxu0
      %v1083 = vadd.f32 0.0, %v1082
      %v1084 = vpop.f32.mrb[0].mxu0
      %v1085 = vadd.f32 0.0, %v1084
      %v1086 = vpop.f32.mrb[0].mxu0
      %v1087 = vadd.f32 0.0, %v1086
      %1088 = vmatprep.mubr.bf16.mxu0 %v985
      %1089 = vmatmul.mubr.bf16.gmra.mrb[0].mxu0 %v984
      %v1090 = vpop.f32.mrb[0].mxu0
      %v1091 = vadd.f32 0.0, %v1090
      %v1092 = vpop.f32.mrb[0].mxu0
      %v1093 = vadd.f32 0.0, %v1092
      %v1094 = vpop.f32.mrb[0].mxu0
      %v1095 = vadd.f32 0.0, %v1094
      %v1096 = vpop.f32.mrb[0].mxu0
      %v1097 = vadd.f32 0.0, %v1096
      %1098 = vmatprep.mubr.bf16.mxu0 %v987
      %1099 = vmatmul.mubr.bf16.gmra.mrb[0].mxu0 %v986
      %v1100 = vpop.f32.mrb[0].mxu0
      %v1101 = vadd.f32 0.0, %v1100
      %v1102 = vpop.f32.mrb[0].mxu0
      %v1103 = vadd.f32 0.0, %v1102
      %v1104 = vpop.f32.mrb[0].mxu0
      %v1105 = vadd.f32 0.0, %v1104
      %v1106 = vpop.f32.mrb[0].mxu0
      %v1107 = vadd.f32 0.0, %v1106
      %1108 = vmatprep.mubr.bf16.mxu0 %v989
      %1109 = vmatmul.mubr.bf16.gmra.mrb[0].mxu0 %v988
      %v1110 = vpop.f32.mrb[0].mxu0
      %v1111 = vadd.f32 0.0, %v1110
      %v1112 = vpop.f32.mrb[0].mxu0
      %v1113 = vadd.f32 0.0, %v1112
      %v1114 = vpop.f32.mrb[0].mxu0
      %v1115 = vadd.f32 0.0, %v1114
      %v1116 = vpop.f32.mrb[0].mxu0
      %v1117 = vadd.f32 0.0, %v1116
      %1118 = vdwg.mxu0
      %v1119 = vmax.f32 %v1041, 0.0
      %v1120 = vmax.f32 %v1043, 0.0
      %v1121 = vmax.f32 %v1045, 0.0
      %v1122 = vmax.f32 %v1047, 0.0
      %v1123 = vmax.f32 %v1051, 0.0
      %v1124 = vmax.f32 %v1053, 0.0
      %v1125 = vmax.f32 %v1055, 0.0
      %v1126 = vmax.f32 %v1057, 0.0
      %v1127 = vmax.f32 %v1061, 0.0
      %v1128 = vmax.f32 %v1063, 0.0
      %v1129 = vmax.f32 %v1065, 0.0
      %v1130 = vmax.f32 %v1067, 0.0
      %v1131 = vmax.f32 %v1071, 0.0
      %v1132 = vmax.f32 %v1073, 0.0
      %v1133 = vmax.f32 %v1075, 0.0
      %v1134 = vmax.f32 %v1077, 0.0
      %v1135 = vmax.f32 %v1081, 0.0
      %v1136 = vmax.f32 %v1083, 0.0
      %v1137 = vmax.f32 %v1085, 0.0
      %v1138 = vmax.f32 %v1087, 0.0
      %v1139 = vmax.f32 %v1091, 0.0
      %v1140 = vmax.f32 %v1093, 0.0
      %v1141 = vmax.f32 %v1095, 0.0
      %v1142 = vmax.f32 %v1097, 0.0
      %v1143 = vmax.f32 %v1101, 0.0
      %v1144 = vmax.f32 %v1103, 0.0
      %v1145 = vmax.f32 %v1105, 0.0
      %v1146 = vmax.f32 %v1107, 0.0
      %v1147 = vmax.f32 %v1111, 0.0
      %v1148 = vmax.f32 %v1113, 0.0
      %v1149 = vmax.f32 %v1115, 0.0
      %v1150 = vmax.f32 %v1117, 0.0
      %v1151 = vpack.c.bf16 %v1121, %v1119
      %v1152 = vpack.c.bf16 %v1122, %v1120
      %v1153 = vpack.c.bf16 %v1125, %v1123
      %v1154 = vpack.c.bf16 %v1126, %v1124
      %v1155 = vpack.c.bf16 %v1129, %v1127
      %v1156 = vpack.c.bf16 %v1130, %v1128
      %v1157 = vpack.c.bf16 %v1133, %v1131
      %v1158 = vpack.c.bf16 %v1134, %v1132
      %v1159 = vpack.c.bf16 %v1137, %v1135
      %v1160 = vpack.c.bf16 %v1138, %v1136
      %v1161 = vpack.c.bf16 %v1141, %v1139
      %v1162 = vpack.c.bf16 %v1142, %v1140
      %v1163 = vpack.c.bf16 %v1145, %v1143
      %v1164 = vpack.c.bf16 %v1146, %v1144
      %v1165 = vpack.c.bf16 %v1149, %v1147
      %v1166 = vpack.c.bf16 %v1150, %v1148
      %1167 = vmatprep.subr.bf16.mxu0 %v1152
      %1168 = vmatpush1.bf16.msra.mxu0 %v1151
      %1169 = vmatprep.subr.bf16.mxu0 %v1154
      %1170 = vmatpush1.bf16.msra.mxu0 %v1153
      %1171 = vmatprep.subr.bf16.mxu0 %v1156
      %1172 = vmatpush1.bf16.msra.mxu0 %v1155
      %1173 = vmatprep.subr.bf16.mxu0 %v1158
      %1174 = vmatpush1.bf16.msra.mxu0 %v1157
      %1175 = vmatprep.subr.bf16.mxu0 %v1160
      %1176 = vmatpush1.bf16.msra.mxu0 %v1159
      %1177 = vmatprep.subr.bf16.mxu0 %v1162
      %1178 = vmatpush1.bf16.msra.mxu0 %v1161
      %1179 = vmatprep.subr.bf16.mxu0 %v1164
      %1180 = vmatpush1.bf16.msra.mxu0 %v1163
      %1181 = vmatprep.subr.bf16.mxu0 %v1166
      %1182 = vmatpush1.bf16.msra.mxu0 %v1165
      %1183 = vmatprep.subr.bf16.mxu0 0
      %1184 = vmatpush1.bf16.msra.mxu0 0
      %1185 = vmatprep.subr.bf16.mxu0 0
      %1186 = vmatpush1.bf16.msra.mxu0 0
      %1187 = vmatprep.subr.bf16.mxu0 0
      %1188 = vmatpush1.bf16.msra.mxu0 0
      %1189 = vmatprep.subr.bf16.mxu0 0
      %1190 = vmatpush1.bf16.msra.mxu0 0
      %1191 = vmatprep.subr.bf16.mxu0 0
      %1192 = vmatpush1.bf16.msra.mxu0 0
      %1193 = vmatprep.subr.bf16.mxu0 0
      %1194 = vmatpush1.bf16.msra.mxu0 0
      %1195 = vmatprep.subr.bf16.mxu0 0
      %1196 = vmatpush1.bf16.msra.mxu0 0
      %1197 = vmatprep.subr.bf16.mxu0 0
      %1198 = vmatpush1.bf16.msra.mxu0 0
      %1199 = vmatprep.mubr.bf16.mxu0 0
      %1200 = vmatmul.mubr.bf16.gmra.mrb[0].mxu0 %v284
      %v1201 = vpop.f32.mrb[0].mxu0
      %v1202 = vadd.f32 0.0, %v1201
      %v1203 = vpop.f32.mrb[0].mxu0
      %v1204 = vadd.f32 0.0, %v1203
      %v1205 = vpop.f32.mrb[0].mxu0
      %v1206 = vpop.f32.mrb[0].mxu0
      %1207 = vdwg.mxu0
      %v1208 = vxor.u32 %v1202, 2147483648
      %v1209 = vxor.u32 %v1204, 2147483648
      %v1210 = vmul.f32 %v1208, 1.442695
      %v1211 = vpow.pop %v1210
      %v1212 = vmul.f32 %v1209, 1.442695
      %v1213 = vpow.pop %v1212
      %v1214 = vadd.f32 %v1211, 1.0
      %v1215 = vadd.f32 %v1213, 1.0
      %v1216 = vrcp.pop %v1214
      %v1217 = vmul.f32 1.0, %v1216
      %v1218 = vrcp.pop %v1215
      %v1219 = vmul.f32 1.0, %v1218
      %v1222 = vcombine.low %v1217, %v1219
      %v1224 = vunpack.c.l.s4 1966171168
      %v1225 = vunpack.c.0.s8 %v1224
      %v1226 = vlaneseq
      %v1227 = vshrl.u32 %v1226, 7
      %v1228 = vsub.s32 %v1225, %v1227
      %v1229 = vrot.slane %v1222, %v1228
      %v1231 = vunpack.c.l.s4 1966171168
      %v1232 = vunpack.c.0.s8 %v1231
      %v1233 = vlaneseq
      %v1234 = vshrl.u32 %v1233, 7
      %v1235 = vsub.s32 %v1232, %v1234
      %v1236 = vrot.slane %v1229, %v1235
      %v1238 = vlaneseq
      %vm1239 = vcmp.ge.s32.totalorder %v1238, 0
      %vm1240 = vcmp.lt.s32.totalorder %v1238, 256
      %vm1241 = vmand %vm1239, %vm1240
      %1242 = vst.msk [vmem:[%s233] sm:$0x3] %vm1241, %v1236
      %s1243 = smul.u32 2, %s20
      %p1244 = scmp.lt.s32.totalorder %s19, 1
      %s1245 = scalar_select %p1244, %s19, 1
      %p1246 = scmp.lt.s32.totalorder %s1243, 1
      %s1247 = scalar_select %p1246, %s1243, 1
      %s1248 = smul.addr %s1245, 2
      %s1249 = sadd.s32 %s1247, %s1248
      %s1250 = scalar_lea.vmem %s4, %s1249
      // Predicated region
      $region37: #{netd_pixel_forward.1} parent=35 // pred_check
        %p1251 = pneg %p138
      $region38: #{netd_pixel_forward.1} parent=35 // pred_check_branch
        %1253 = sbr.rel (%p1251) target = $region40
      $region39: #{netd_pixel_forward.1} parent=35 // pred_region
        %s1254 = smul.u32 2, %s20
      $region40: #{netd_pixel_forward.1} parent=35 // pred_fallthru
        _
    $region36: #{netd_pixel_forward.1} parent=5 // pred_fallthru
      _
    %p1255 = scmp.le.s32.totalorder 2, %s10
    // Predicated region
    $region41: #{netd_pixel_forward.1} parent=5 // pred_check
      %p1256 = pneg %p1255
    $region42: #{netd_pixel_forward.1} parent=5 // pred_check_branch
      %1258 = sbr.rel (%p1256) target = $region44
    $region43: #{netd_pixel_forward.1} parent=5 // pred_region
      %s1259 = ssub.s32 %s10, 2
      // Predicated region
      $region45: #{netd_pixel_forward.1} parent=43 // pred_check
        %p1260 = pneg %p144
      $region46: #{netd_pixel_forward.1} parent=43 // pred_check_branch
        %1262 = sbr.rel (%p1260) target = $region48
      $region47: #{netd_pixel_forward.1} parent=43 // pred_region
        %s1263 = smul.u32 2, %s22
        %p1264 = scmp.lt.s32.totalorder %s21, 1
        %s1265 = scalar_select %p1264, %s21, 1
        %p1266 = scmp.lt.s32.totalorder %s1263, 1
        %s1267 = scalar_select %p1266, %s1263, 1
        %s1268 = smul.addr %s1265, 2
        %s1269 = sadd.s32 %s1267, %s1268
        %s1270 = scalar_lea.vmem %s4, %s1269
      $region48: #{netd_pixel_forward.1} parent=43 // pred_fallthru
        _
    $region44: #{netd_pixel_forward.1} parent=5 // pred_fallthru
      _
  $region6: #{netd_pixel_forward.1} parent=0 // loop_footer
    %s14 = sadd.s32 1, %s10
  $region7: #{netd_pixel_forward.1} parent=0 // loop_footer_branch
    %9 = sbr.rel target = $region3
  $region8: #{netd_pixel_forward.1} parent=0 // loop_exit
    _

</llo_original>
